<compile_context>
chip_gen: v7x
topology: tpu7x:2x2x1
jax: 0.10.0
libtpu: 0.0.40
codegen_flags: <defaults>
</compile_context>

<pallas_src>
import functools

import jax
import jax.numpy as jnp
from jax.experimental import pallas as pl
from jax.experimental.pallas import tpu as pltpu

LN_EPS = 1e-5  # torch.nn.LayerNorm default


def _round_up(n, m):
    return -(-n // m) * m


def hsr_kernel(x_ref, w1_ref, ln_ref, w2m_ref, w2p_ref, b2_ref,
               mean_ref, logprec_ref, *, hid, hid_pad):
    """One row-tile of the fused two-head forward.

    x_ref       : (TM, IN)      bf16 input rows
    w1_ref      : (IN, 2*HP)    bf16 [w1_mean | w1_logprec], hid zero-padded to HP
    ln_ref      : (3, 2*HP)     f32 rows = b1_cat, gamma_cat, beta_cat (zero pad lanes)
    w2m_ref     : (HP, OUT)     bf16 mean-head second-layer weights (zero pad rows)
    w2p_ref     : (HP, OUT)     bf16 logprec-head second-layer weights (zero pad rows)
    b2_ref      : (2, OUT)      f32 [b2_mean ; b2_logprec]
    mean_ref    : (TM, OUT)     f32 output
    logprec_ref : (TM, OUT)     f32 output
    """
    x = x_ref[...]

    # --- fused first linear for both heads (N = 2*HP fills the 256-wide MXU) ---------
    h = jnp.dot(x, w1_ref[...], preferred_element_type=jnp.float32)   # (TM, 2*HP) f32
    h = h + ln_ref[0:1, :]                                            # + b1_cat

    # --- segmented LayerNorm: independent stats per lane-half (per head) -------------
    lane = jax.lax.broadcasted_iota(jnp.int32, (1, 2 * hid_pad), 1)
    first_half = lane < hid_pad
    inv = 1.0 / hid   # divide by the true hid; padded lanes of h are exactly zero

    mu_m = jnp.sum(h[:, :hid_pad], axis=-1, keepdims=True) * inv
    mu_p = jnp.sum(h[:, hid_pad:], axis=-1, keepdims=True) * inv
    mu = jnp.where(first_half, mu_m, mu_p)            # lane-index select, no relayout

    c = h - mu                                        # two-pass (stable) variance
    if hid != hid_pad:                                # mask pad lanes out of (h-mu)^2
        valid = jnp.logical_or(
            lane < hid,
            jnp.logical_and(lane >= hid_pad, lane < hid_pad + hid))
        c = jnp.where(valid, c, 0.0)
    var_m = jnp.sum(c[:, :hid_pad] ** 2, axis=-1, keepdims=True) * inv
    var_p = jnp.sum(c[:, hid_pad:] ** 2, axis=-1, keepdims=True) * inv
    rstd = jnp.where(first_half,
                     jax.lax.rsqrt(var_m + LN_EPS),
                     jax.lax.rsqrt(var_p + LN_EPS))

    hn = c * rstd * ln_ref[1:2, :] + ln_ref[2:3, :]   # gamma * xhat + beta (zero in pad)
    hn = jnp.maximum(hn, 0.0).astype(jnp.bfloat16)    # ReLU; Dropout(p=0) is identity

    # --- second linear: two 128-lane-aligned split dots + lane-dense f32 stores ------
    mean_ref[...] = (jnp.dot(hn[:, :hid_pad], w2m_ref[...],
                             preferred_element_type=jnp.float32) + b2_ref[0:1, :])
    logprec_ref[...] = (jnp.dot(hn[:, hid_pad:], w2p_ref[...],
                                preferred_element_type=jnp.float32) + b2_ref[1:2, :])


def pack_params(mean_params, logprec_params):
    """Pack both heads' parameters once (call outside the per-step forward).

    Returns bf16 matmul weights and an f32 LayerNorm/bias slab; hid is zero-padded to a
    multiple of 128 so the fused lane halves stay on vreg boundaries.
    """
    mp, pp = mean_params, logprec_params
    in_dims, hid = mp["w1"].shape
    out_dims = mp["w2"].shape[1]
    hid_pad = _round_up(hid, 128)
    dh = hid_pad - hid

    pad_cols = lambda a: jnp.pad(a, ((0, 0), (0, dh)))   # (.., H) -> (.., HP)
    pad_rows = lambda a: jnp.pad(a, ((0, dh), (0, 0)))   # (H, ..) -> (HP, ..)

    w1_cat = jnp.concatenate([pad_cols(mp["w1"]), pad_cols(pp["w1"])],
                             axis=1).astype(jnp.bfloat16)                 # (IN, 2HP)
    ln_pack = jnp.concatenate([                                           # (3, 2HP) f32
        jnp.concatenate([pad_cols(mp["b1"]), pad_cols(pp["b1"])], axis=1),
        jnp.concatenate([pad_cols(mp["gamma"]), pad_cols(pp["gamma"])], axis=1),
        jnp.concatenate([pad_cols(mp["beta"]), pad_cols(pp["beta"])], axis=1),
    ], axis=0).astype(jnp.float32)
    w2_mean = pad_rows(mp["w2"]).astype(jnp.bfloat16)                     # (HP, OUT)
    w2_logprec = pad_rows(pp["w2"]).astype(jnp.bfloat16)                  # (HP, OUT)
    b2 = jnp.concatenate([mp["b2"], pp["b2"]], axis=0).astype(jnp.float32)  # (2, OUT)

    return {
        "w1": w1_cat, "ln": ln_pack, "w2_mean": w2_mean, "w2_logprec": w2_logprec,
        "b2": b2, "hid": hid, "hid_pad": hid_pad,
        "in_dims": in_dims, "out_dims": out_dims,
    }


def hsr_forward(x, packed, *, tm=None):
    """x: (B, IN) float. `packed`: result of pack_params (computed once per param set)."""
    B, in_dims = x.shape
    hid, hid_pad = packed["hid"], packed["hid_pad"]
    out_dims = packed["b2"].shape[1]
    assert packed["w1"].shape[0] == in_dims

    if tm is None:
        # >=2 grid steps for B>=16 so both v7x TensorCores get a tile; tiles up to 512
        # rows amortize the ~0.35us/step overhead on single-core v5e/v6e.
        tm = max(8, min(512, _round_up(pl.cdiv(B, 2), 8)))
    grid = (pl.cdiv(B, tm),)

    xb = x.astype(jnp.bfloat16)   # bf16 MXU operand; halves the streaming-input bytes

    cost = pl.CostEstimate(
        flops=2 * B * in_dims * 2 * hid_pad + 2 * 2 * B * hid_pad * out_dims,
        transcendentals=2 * B,
        bytes_accessed=(xb.size * 2 + packed["w1"].size * 2 + packed["ln"].size * 4
                        + packed["w2_mean"].size * 2 + packed["w2_logprec"].size * 2
                        + packed["b2"].size * 4 + 2 * B * out_dims * 4),
    )

    kernel = functools.partial(hsr_kernel, hid=hid, hid_pad=hid_pad)

    mean, logprec = pl.pallas_call(
        kernel,
        grid=grid,
        in_specs=[
            pl.BlockSpec((tm, in_dims), lambda i: (i, 0)),            # x rows (streamed)
            pl.BlockSpec((in_dims, 2 * hid_pad), lambda i: (0, 0)),   # w1_cat (grid-invariant)
            pl.BlockSpec((3, 2 * hid_pad), lambda i: (0, 0)),         # b1/gamma/beta slab
            pl.BlockSpec((hid_pad, out_dims), lambda i: (0, 0)),      # w2 mean head
            pl.BlockSpec((hid_pad, out_dims), lambda i: (0, 0)),      # w2 logprec head
            pl.BlockSpec((2, out_dims), lambda i: (0, 0)),            # b2 (both heads)
        ],
        out_specs=[
            pl.BlockSpec((tm, out_dims), lambda i: (i, 0)),           # mean
            pl.BlockSpec((tm, out_dims), lambda i: (i, 0)),           # logprec
        ],
        out_shape=[
            jax.ShapeDtypeStruct((B, out_dims), jnp.float32),
            jax.ShapeDtypeStruct((B, out_dims), jnp.float32),
        ],
        compiler_params=pltpu.CompilerParams(
            dimension_semantics=("parallel",)),   # shard batch tiles across v7x TCs
        cost_estimate=cost,
    )(xb, packed["w1"], packed["ln"], packed["w2_mean"], packed["w2_logprec"], packed["b2"])
    return mean, logprec


def init_mlp_params(key, in_dims, hidden_dims, out_dims):
    """Deterministic init mimicking torch.nn.Linear default (U[-1/sqrt(fan_in), +])."""
    k1, k2, k3, k4 = jax.random.split(key, 4)
    s1 = 1.0 / jnp.sqrt(in_dims)
    s2 = 1.0 / jnp.sqrt(hidden_dims)
    return {
        # stored transposed: (IN, HID) and (HID, OUT)
        "w1": jax.random.uniform(k1, (in_dims, hidden_dims), jnp.float32, -s1, s1),
        "b1": jax.random.uniform(k2, (1, hidden_dims), jnp.float32, -s1, s1),
        "gamma": jnp.ones((1, hidden_dims), jnp.float32),
        "beta": jnp.zeros((1, hidden_dims), jnp.float32),
        "w2": jax.random.uniform(k3, (hidden_dims, out_dims), jnp.float32, -s2, s2),
        "b2": jax.random.uniform(k4, (1, out_dims), jnp.float32, -s2, s2),
    }


def reference_forward(x, mp, pp):
    """Pure-JAX f32 reference matching the PyTorch module (two-pass biased LayerNorm)."""
    def mlp(p):
        h = x @ p["w1"] + p["b1"]
        mu = jnp.mean(h, axis=-1, keepdims=True)
        var = jnp.mean((h - mu) ** 2, axis=-1, keepdims=True)
        hn = (h - mu) / jnp.sqrt(var + LN_EPS) * p["gamma"] + p["beta"]
        hn = jnp.maximum(hn, 0.0)
        return hn @ p["w2"] + p["b2"]
    return mlp(mp), mlp(pp)


if __name__ == "__main__":
    # Small shapes consistent with the module's (B, in_dims) -> (B, out_dims) forward.
    # HIDDEN=192 (not a 128 multiple) exercises the padded / masked LayerNorm path.
    B, IN_DIMS, HIDDEN, OUT_DIMS = 16, 124, 192, 128

    key = jax.random.PRNGKey(0)
    kx, km, kp = jax.random.split(key, 3)

    x = jax.random.normal(kx, (B, IN_DIMS), jnp.float32)
    mean_params = init_mlp_params(km, IN_DIMS, HIDDEN, OUT_DIMS)
    logprec_params = init_mlp_params(kp, IN_DIMS, HIDDEN, OUT_DIMS)

    packed = pack_params(mean_params, logprec_params)   # packed once; params are static
    mean, logprec = hsr_forward(x, packed)
    jax.block_until_ready((mean, logprec))

    ref_mean, ref_logprec = reference_forward(x, mean_params, logprec_params)
    assert mean.shape == (B, OUT_DIMS) and logprec.shape == (B, OUT_DIMS)
    # bf16 MXU operands (f32 accumulation) -> loosened tolerance vs the f32 reference.
    assert jnp.allclose(mean, ref_mean, atol=3e-2, rtol=3e-2), \
        float(jnp.max(jnp.abs(mean - ref_mean)))
    assert jnp.allclose(logprec, ref_logprec, atol=3e-2, rtol=3e-2), \
        float(jnp.max(jnp.abs(logprec - ref_logprec)))

    print("KERNEL_OK")
</pallas_src>

<mosaic_0001>
module attributes {stable_mosaic.version = 11 : i64} {
  func.func @hsr_kernel(%arg0: i32, %arg1: memref<8x124xbf16, #tpu.memory_space<vmem>>, %arg2: memref<124x512xbf16, #tpu.memory_space<vmem>>, %arg3: memref<3x512xf32, #tpu.memory_space<vmem>>, %arg4: memref<256x128xbf16, #tpu.memory_space<vmem>>, %arg5: memref<256x128xbf16, #tpu.memory_space<vmem>>, %arg6: memref<2x128xf32, #tpu.memory_space<vmem>>, %arg7: memref<8x128xf32, #tpu.memory_space<vmem>>, %arg8: memref<8x128xf32, #tpu.memory_space<vmem>>) attributes {dimension_semantics = [#tpu.dimension_semantics<parallel>], iteration_bounds = array<i64: 2>, scalar_prefetch = 0 : i64, scratch_operands = 0 : i64, tpu.core_type = #tpu.core_type<tc>, window_params = [{transform_indices = @transform_0, window_bounds = array<i64: 8, 124>}, {pipeline_mode = #tpu.pipeline_mode<synchronous>, transform_indices = @transform_1, window_bounds = array<i64: 124, 512>}, {pipeline_mode = #tpu.pipeline_mode<synchronous>, transform_indices = @transform_2, window_bounds = array<i64: 3, 512>}, {pipeline_mode = #tpu.pipeline_mode<synchronous>, transform_indices = @transform_3, window_bounds = array<i64: 256, 128>}, {pipeline_mode = #tpu.pipeline_mode<synchronous>, transform_indices = @transform_4, window_bounds = array<i64: 256, 128>}, {pipeline_mode = #tpu.pipeline_mode<synchronous>, transform_indices = @transform_5, window_bounds = array<i64: 2, 128>}, {transform_indices = @transform_6, window_bounds = array<i64: 8, 128>}, {transform_indices = @transform_7, window_bounds = array<i64: 8, 128>}]} {
    %c0 = arith.constant 0 : index
    %c0_0 = arith.constant 0 : index
    %0 = vector.load %arg1[%c0, %c0_0] : memref<8x124xbf16, #tpu.memory_space<vmem>>, vector<8x124xbf16>
    %c0_1 = arith.constant 0 : index
    %c0_2 = arith.constant 0 : index
    %1 = vector.load %arg2[%c0_1, %c0_2] : memref<124x512xbf16, #tpu.memory_space<vmem>>, vector<124x512xbf16>
    %cst = arith.constant dense<0.000000e+00> : vector<8x512xf32>
    %2 = tpu.matmul %0, %1, %cst {dimension_numbers = #tpu.dot_dimension_numbers<[1], [0], [0], [1], [0, 0, 1, 1], [], []>} : vector<8x124xbf16>, vector<124x512xbf16>, vector<8x512xf32> -> vector<8x512xf32>
    %c0_3 = arith.constant 0 : index
    %c0_4 = arith.constant 0 : index
    %3 = vector.load %arg3[%c0_3, %c0_4] : memref<3x512xf32, #tpu.memory_space<vmem>>, vector<1x512xf32>
    %4 = vector.broadcast %3 : vector<1x512xf32> to vector<8x512xf32>
    %5 = arith.addf %2, %4 : vector<8x512xf32>
    %6 = tpu.iota {dimensions = array<i32: 1>} : vector<1x512xi32>
    %c256_i32 = arith.constant 256 : i32
    %7 = vector.broadcast %c256_i32 : i32 to vector<1x512xi32>
    %8 = arith.cmpi slt, %6, %7 : vector<1x512xi32>
    %9 = vector.extract_strided_slice %5 {offsets = [0, 0], sizes = [8, 256], strides = [1, 1]} : vector<8x512xf32> to vector<8x256xf32>
    %cst_5 = arith.constant dense<0.000000e+00> : vector<8xf32>
    %10 = vector.multi_reduction <add>, %9, %cst_5 [1] : vector<8x256xf32> to vector<8xf32>
    %11 = vector.shape_cast %10 : vector<8xf32> to vector<8x1xf32>
    %cst_6 = arith.constant 0.00520833349 : f32
    %12 = vector.broadcast %cst_6 : f32 to vector<8x1xf32>
    %13 = arith.mulf %11, %12 : vector<8x1xf32>
    %14 = vector.extract_strided_slice %5 {offsets = [0, 256], sizes = [8, 256], strides = [1, 1]} : vector<8x512xf32> to vector<8x256xf32>
    %cst_7 = arith.constant dense<0.000000e+00> : vector<8xf32>
    %15 = vector.multi_reduction <add>, %14, %cst_7 [1] : vector<8x256xf32> to vector<8xf32>
    %16 = vector.shape_cast %15 : vector<8xf32> to vector<8x1xf32>
    %cst_8 = arith.constant 0.00520833349 : f32
    %17 = vector.broadcast %cst_8 : f32 to vector<8x1xf32>
    %18 = arith.mulf %16, %17 : vector<8x1xf32>
    %19 = vector.shape_cast %8 : vector<1x512xi1> to vector<1x512xi1>
    %20 = vector.broadcast %19 : vector<1x512xi1> to vector<8x512xi1>
    %21 = vector.shape_cast %13 : vector<8x1xf32> to vector<8x1xf32>
    %22 = vector.broadcast %21 : vector<8x1xf32> to vector<8x512xf32>
    %23 = vector.shape_cast %18 : vector<8x1xf32> to vector<8x1xf32>
    %24 = vector.broadcast %23 : vector<8x1xf32> to vector<8x512xf32>
    %25 = arith.select %20, %22, %24 : vector<8x512xi1>, vector<8x512xf32>
    %26 = arith.subf %5, %25 : vector<8x512xf32>
    %c192_i32 = arith.constant 192 : i32
    %27 = vector.broadcast %c192_i32 : i32 to vector<1x512xi32>
    %28 = arith.cmpi slt, %6, %27 : vector<1x512xi32>
    %c256_i32_9 = arith.constant 256 : i32
    %29 = vector.broadcast %c256_i32_9 : i32 to vector<1x512xi32>
    %30 = arith.cmpi sge, %6, %29 : vector<1x512xi32>
    %c448_i32 = arith.constant 448 : i32
    %31 = vector.broadcast %c448_i32 : i32 to vector<1x512xi32>
    %32 = arith.cmpi slt, %6, %31 : vector<1x512xi32>
    %33 = arith.andi %30, %32 : vector<1x512xi1>
    %34 = arith.ori %28, %33 : vector<1x512xi1>
    %cst_10 = arith.constant 0.000000e+00 : f32
    %35 = vector.shape_cast %34 : vector<1x512xi1> to vector<1x512xi1>
    %36 = vector.broadcast %35 : vector<1x512xi1> to vector<8x512xi1>
    %37 = vector.broadcast %cst_10 : f32 to vector<8x512xf32>
    %38 = arith.select %36, %26, %37 : vector<8x512xi1>, vector<8x512xf32>
    %39 = vector.extract_strided_slice %38 {offsets = [0, 0], sizes = [8, 256], strides = [1, 1]} : vector<8x512xf32> to vector<8x256xf32>
    %40 = arith.mulf %39, %39 : vector<8x256xf32>
    %cst_11 = arith.constant dense<0.000000e+00> : vector<8xf32>
    %41 = vector.multi_reduction <add>, %40, %cst_11 [1] : vector<8x256xf32> to vector<8xf32>
    %42 = vector.shape_cast %41 : vector<8xf32> to vector<8x1xf32>
    %cst_12 = arith.constant 0.00520833349 : f32
    %43 = vector.broadcast %cst_12 : f32 to vector<8x1xf32>
    %44 = arith.mulf %42, %43 : vector<8x1xf32>
    %45 = vector.extract_strided_slice %38 {offsets = [0, 256], sizes = [8, 256], strides = [1, 1]} : vector<8x512xf32> to vector<8x256xf32>
    %46 = arith.mulf %45, %45 : vector<8x256xf32>
    %cst_13 = arith.constant dense<0.000000e+00> : vector<8xf32>
    %47 = vector.multi_reduction <add>, %46, %cst_13 [1] : vector<8x256xf32> to vector<8xf32>
    %48 = vector.shape_cast %47 : vector<8xf32> to vector<8x1xf32>
    %cst_14 = arith.constant 0.00520833349 : f32
    %49 = vector.broadcast %cst_14 : f32 to vector<8x1xf32>
    %50 = arith.mulf %48, %49 : vector<8x1xf32>
    %cst_15 = arith.constant 9.99999974E-6 : f32
    %51 = vector.broadcast %cst_15 : f32 to vector<8x1xf32>
    %52 = arith.addf %44, %51 : vector<8x1xf32>
    %53 = math.rsqrt %52 : vector<8x1xf32>
    %cst_16 = arith.constant 9.99999974E-6 : f32
    %54 = vector.broadcast %cst_16 : f32 to vector<8x1xf32>
    %55 = arith.addf %50, %54 : vector<8x1xf32>
    %56 = math.rsqrt %55 : vector<8x1xf32>
    %57 = vector.shape_cast %8 : vector<1x512xi1> to vector<1x512xi1>
    %58 = vector.broadcast %57 : vector<1x512xi1> to vector<8x512xi1>
    %59 = vector.shape_cast %53 : vector<8x1xf32> to vector<8x1xf32>
    %60 = vector.broadcast %59 : vector<8x1xf32> to vector<8x512xf32>
    %61 = vector.shape_cast %56 : vector<8x1xf32> to vector<8x1xf32>
    %62 = vector.broadcast %61 : vector<8x1xf32> to vector<8x512xf32>
    %63 = arith.select %58, %60, %62 : vector<8x512xi1>, vector<8x512xf32>
    %64 = arith.mulf %38, %63 : vector<8x512xf32>
    %c1 = arith.constant 1 : index
    %c0_17 = arith.constant 0 : index
    %65 = vector.load %arg3[%c1, %c0_17] : memref<3x512xf32, #tpu.memory_space<vmem>>, vector<1x512xf32>
    %66 = vector.broadcast %65 : vector<1x512xf32> to vector<8x512xf32>
    %67 = arith.mulf %64, %66 : vector<8x512xf32>
    %c2 = arith.constant 2 : index
    %c0_18 = arith.constant 0 : index
    %68 = vector.load %arg3[%c2, %c0_18] : memref<3x512xf32, #tpu.memory_space<vmem>>, vector<1x512xf32>
    %69 = vector.broadcast %68 : vector<1x512xf32> to vector<8x512xf32>
    %70 = arith.addf %67, %69 : vector<8x512xf32>
    %cst_19 = arith.constant 0.000000e+00 : f32
    %71 = vector.broadcast %cst_19 : f32 to vector<8x512xf32>
    %72 = arith.maximumf %70, %71 : vector<8x512xf32>
    %73 = arith.truncf %72 : vector<8x512xf32> to vector<8x512xbf16>
    %74 = vector.extract_strided_slice %73 {offsets = [0, 0], sizes = [8, 256], strides = [1, 1]} : vector<8x512xbf16> to vector<8x256xbf16>
    %c0_20 = arith.constant 0 : index
    %c0_21 = arith.constant 0 : index
    %75 = vector.load %arg4[%c0_20, %c0_21] : memref<256x128xbf16, #tpu.memory_space<vmem>>, vector<256x128xbf16>
    %cst_22 = arith.constant dense<0.000000e+00> : vector<8x128xf32>
    %76 = tpu.matmul %74, %75, %cst_22 {dimension_numbers = #tpu.dot_dimension_numbers<[1], [0], [0], [1], [0, 0, 1, 1], [], []>} : vector<8x256xbf16>, vector<256x128xbf16>, vector<8x128xf32> -> vector<8x128xf32>
    %c0_23 = arith.constant 0 : index
    %c0_24 = arith.constant 0 : index
    %77 = vector.load %arg6[%c0_23, %c0_24] : memref<2x128xf32, #tpu.memory_space<vmem>>, vector<1x128xf32>
    %78 = vector.broadcast %77 : vector<1x128xf32> to vector<8x128xf32>
    %79 = arith.addf %76, %78 : vector<8x128xf32>
    %c0_25 = arith.constant 0 : index
    %c0_26 = arith.constant 0 : index
    %80 = vector.load %arg7[%c0_25, %c0_26] : memref<8x128xf32, #tpu.memory_space<vmem>>, vector<8x128xf32>
    tpu.vector_store %arg7[%c0_25, %c0_26], %79 {strides = array<i32>} : memref<8x128xf32, #tpu.memory_space<vmem>>, vector<8x128xf32>,
    %81 = vector.extract_strided_slice %73 {offsets = [0, 256], sizes = [8, 256], strides = [1, 1]} : vector<8x512xbf16> to vector<8x256xbf16>
    %c0_27 = arith.constant 0 : index
    %c0_28 = arith.constant 0 : index
    %82 = vector.load %arg5[%c0_27, %c0_28] : memref<256x128xbf16, #tpu.memory_space<vmem>>, vector<256x128xbf16>
    %cst_29 = arith.constant dense<0.000000e+00> : vector<8x128xf32>
    %83 = tpu.matmul %81, %82, %cst_29 {dimension_numbers = #tpu.dot_dimension_numbers<[1], [0], [0], [1], [0, 0, 1, 1], [], []>} : vector<8x256xbf16>, vector<256x128xbf16>, vector<8x128xf32> -> vector<8x128xf32>
    %c1_30 = arith.constant 1 : index
    %c0_31 = arith.constant 0 : index
    %84 = vector.load %arg6[%c1_30, %c0_31] : memref<2x128xf32, #tpu.memory_space<vmem>>, vector<1x128xf32>
    %85 = vector.broadcast %84 : vector<1x128xf32> to vector<8x128xf32>
    %86 = arith.addf %83, %85 : vector<8x128xf32>
    %c0_32 = arith.constant 0 : index
    %c0_33 = arith.constant 0 : index
    %87 = vector.load %arg8[%c0_32, %c0_33] : memref<8x128xf32, #tpu.memory_space<vmem>>, vector<8x128xf32>
    tpu.vector_store %arg8[%c0_32, %c0_33], %86 {strides = array<i32>} : memref<8x128xf32, #tpu.memory_space<vmem>>, vector<8x128xf32>,
    return
  }
  func.func @transform_0(%arg0: i32) -> (i32, i32) {
    %c0_i32 = arith.constant 0 : i32
    %c0_i32_0 = arith.constant 0 : i32
    return %arg0, %c0_i32 : i32, i32
  }
  func.func @transform_1(%arg0: i32) -> (i32, i32) {
    %c0_i32 = arith.constant 0 : i32
    %c0_i32_0 = arith.constant 0 : i32
    %c0_i32_1 = arith.constant 0 : i32
    return %c0_i32, %c0_i32_0 : i32, i32
  }
  func.func @transform_2(%arg0: i32) -> (i32, i32) {
    %c0_i32 = arith.constant 0 : i32
    %c0_i32_0 = arith.constant 0 : i32
    %c0_i32_1 = arith.constant 0 : i32
    return %c0_i32, %c0_i32_0 : i32, i32
  }
  func.func @transform_3(%arg0: i32) -> (i32, i32) {
    %c0_i32 = arith.constant 0 : i32
    %c0_i32_0 = arith.constant 0 : i32
    %c0_i32_1 = arith.constant 0 : i32
    return %c0_i32, %c0_i32_0 : i32, i32
  }
  func.func @transform_4(%arg0: i32) -> (i32, i32) {
    %c0_i32 = arith.constant 0 : i32
    %c0_i32_0 = arith.constant 0 : i32
    %c0_i32_1 = arith.constant 0 : i32
    return %c0_i32, %c0_i32_0 : i32, i32
  }
  func.func @transform_5(%arg0: i32) -> (i32, i32) {
    %c0_i32 = arith.constant 0 : i32
    %c0_i32_0 = arith.constant 0 : i32
    %c0_i32_1 = arith.constant 0 : i32
    return %c0_i32, %c0_i32_0 : i32, i32
  }
  func.func @transform_6(%arg0: i32) -> (i32, i32) {
    %c0_i32 = arith.constant 0 : i32
    %c0_i32_0 = arith.constant 0 : i32
    return %arg0, %c0_i32 : i32, i32
  }
  func.func @transform_7(%arg0: i32) -> (i32, i32) {
    %c0_i32 = arith.constant 0 : i32
    %c0_i32_0 = arith.constant 0 : i32
    return %arg0, %c0_i32 : i32, i32
  }
}

</mosaic_0001>

<llo_original>
// kernel: tpu_custom_call.1
$region0: #{tpu_custom_call.1}
  #allocation0 [shape = 'u32[]', space=smem, size = 0x4, offset = 0x4, fixed_abs, tag = 'smem constant byte address 0x4 - core index']
  #allocation1 [shape = 'u32[144,128]{1,0:T(1,128)}', space=vmem, size = 0x12000, scoped, tag = 'internal scratch']
  %s0 = inlined_call_operand.hbm [shape: bf16[16,124], index: 0, kind: input, shape index: {}]
  %s1 = inlined_call_operand.hbm [shape: bf16[124,512], index: 1, kind: input, shape index: {}]
  %s2 = inlined_call_operand.hbm [shape: f32[3,512], index: 2, kind: input, shape index: {}]
  %s3 = inlined_call_operand.hbm [shape: bf16[256,128], index: 3, kind: input, shape index: {}]
  %s4 = inlined_call_operand.hbm [shape: bf16[256,128], index: 4, kind: input, shape index: {}]
  %s5 = inlined_call_operand.vmem [shape: f32[2,128], index: 5, kind: input, shape index: {}]
  %s6 = inlined_call_operand.hbm [shape: f32[16,128], index: 6, kind: output, shape index: {0}]
  %s7 = inlined_call_operand.hbm [shape: f32[16,128], index: 7, kind: output, shape index: {1}]
  %8 = xla_tuple %s6, %s7
  %s9 = sld [smem:[#allocation0]]
  $region85: #{tpu_custom_call.1} parent=0
    _
  %s11 = ssub.s32 1, %s9
  %s12 = scalar_select 0, %s11, %s9
  $region1: #{tpu_custom_call.1} parent=0
    #allocation2 [shape = 'u8[4096]{0}', space=vmem, size = 0x1000, scoped, tag = 'input window, operand 0']
    #allocation3 [shape = 's32[2]{0}', space=sflag, size = 0x8, scoped, tag = 'scoped memory for tpu_custom_call.1']
    #allocation4 [shape = 's32[2]{0}', space=sflag, size = 0x8, scoped, tag = 'scoped memory for tpu_custom_call.1']
    #allocation5 [shape = 'u8[131072]{0}', space=vmem, size = 0x20000, scoped, tag = 'input window, operand 1, single buffered']
    #allocation6 [shape = 's32[1]{0}', space=sflag, size = 0x4, scoped, tag = 'scoped memory for tpu_custom_call.1']
    #allocation7 [shape = 'u8[8192]{0}', space=vmem, size = 0x2000, scoped, tag = 'input window, operand 2, single buffered']
    #allocation8 [shape = 'u8[65536]{0}', space=vmem, size = 0x10000, scoped, tag = 'input window, operand 3, single buffered']
    #allocation9 [shape = 's32[1]{0}', space=sflag, size = 0x4, scoped, tag = 'scoped memory for tpu_custom_call.1']
    #allocation10 [shape = 'u8[65536]{0}', space=vmem, size = 0x10000, scoped, tag = 'input window, operand 4, single buffered']
    #allocation11 [shape = 'u8[8192]{0}', space=vmem, size = 0x2000, scoped, tag = 'output window, operand 0']
    #allocation12 [shape = 'u8[8192]{0}', space=vmem, size = 0x2000, scoped, tag = 'output window, operand 1']
    #allocation13 [shape = 's32[2]{0}', space=sflag, size = 0x8, scoped, tag = 'scoped memory for tpu_custom_call.1']
    %13 = vsyncpa [#allocation3], 0
    %s14 = scalar_lea.sflag [#allocation3], 1
    %15 = vsyncpa %s14, 0
    %16 = vsyncpa [#allocation6], 0
    %17 = vsyncpa [#allocation9], 0
    %18 = vsyncpa [#allocation4], 0
    %s19 = scalar_lea.sflag [#allocation4], 1
    %20 = vsyncpa %s19, 0
    %21 = vsyncpa [#allocation13], 0
    %s22 = scalar_lea.sflag [#allocation13], 1
    %23 = vsyncpa %s22, 0
    loop: start=0, step=1, limit=4
    $region2: #{tpu_custom_call.1} parent=1 // loop_pre_header
      _
    $region3: #{tpu_custom_call.1} parent=1 // loop_header
      %s25 = sphi 0, %s29
      %p26 = scmp.ge.s32.totalorder %s25, 4
      %s35 = sphi 0, %s37
      %s38 = sphi 0, %s35
      %s39 = sphi 0, %s38
      %s55 = sphi 0, %s39
      %s59 = sphi 0, %s59
      %s61 = sphi 0, %s59
      %s62 = sphi 0, %s61
      %s76 = sphi 0, %s62
      %s80 = sphi 0, %s80
      %s82 = sphi 0, %s80
      %s83 = sphi 0, %s82
      %s97 = sphi 0, %s83
      %s101 = sphi 0, %s101
      %s103 = sphi 0, %s101
      %s104 = sphi 0, %s103
      %s118 = sphi 0, %s104
      %s122 = sphi 0, %s122
      %s124 = sphi 0, %s122
      %s125 = sphi 0, %s124
      %s139 = sphi 0, %s125
      %s143 = sphi 0, %s143
      %s145 = sphi 0, %s143
      %s146 = sphi 0, %s145
      %s160 = sphi 0, %s146
      %s166 = sphi 0, %s168
      %s169 = sphi 0, %s166
      %s170 = sphi 0, %s169
      %s186 = sphi 0, %s170
      %s192 = sphi 0, %s194
      %s195 = sphi 0, %s192
      %s196 = sphi 0, %s195
      %s212 = sphi 0, %s196
    $region4: #{tpu_custom_call.1} parent=1 // loop_header_branch
      %28 = sbr.rel (%p26) target = $region8
    $region5: #{tpu_custom_call.1} parent=1 // loop_body
      %s30 = ssub.s32 %s25, 1
      %s31 = ssub.s32 %s25, 2
      %s32 = sadd.s32 %s25, 1
      %s33 = ssub.s32 %s25, %s32
      %p34 = scmp.eq.s32.totalorder %s33, 0
      %s36 = sadd.s32 %s35, 1
      %s37 = scalar_select %p34, %s35, %s36
      %p40 = pneg %p34
      %p41 = scmp.eq.s32.totalorder %s25, 1
      %p42 = por %p40, %p41
      %p43 = scmp.ne.s32.totalorder %s35, %s38
      %p44 = scmp.eq.s32.totalorder %s25, 0
      %p45 = por %p43, %p44
      %p46 = scmp.ne.s32.totalorder %s35, %s38
      %p47 = scmp.eq.s32.totalorder %s30, 1
      %p48 = por %p46, %p47
      %p49 = scmp.ne.s32.totalorder %s38, %s39
      %p50 = scmp.eq.s32.totalorder %s30, 0
      %p51 = por %p49, %p50
      %p52 = scmp.ne.s32.totalorder %s38, %s39
      %p53 = scmp.eq.s32.totalorder %s31, 1
      %p54 = por %p52, %p53
      %p56 = scmp.ne.s32.totalorder %s39, %s55
      %p57 = scmp.eq.s32.totalorder %s31, 0
      %p58 = por %p56, %p57
      %s60 = sadd.s32 %s59, 1
      %p63 = scmp.eq.s32.totalorder %s25, 1
      %p64 = scmp.ne.s32.totalorder %s59, %s61
      %p65 = scmp.eq.s32.totalorder %s25, 0
      %p66 = por %p64, %p65
      %p67 = scmp.ne.s32.totalorder %s59, %s61
      %p68 = scmp.eq.s32.totalorder %s30, 1
      %p69 = por %p67, %p68
      %p70 = scmp.ne.s32.totalorder %s61, %s62
      %p71 = scmp.eq.s32.totalorder %s30, 0
      %p72 = por %p70, %p71
      %p73 = scmp.ne.s32.totalorder %s61, %s62
      %p74 = scmp.eq.s32.totalorder %s31, 1
      %p75 = por %p73, %p74
      %p77 = scmp.ne.s32.totalorder %s62, %s76
      %p78 = scmp.eq.s32.totalorder %s31, 0
      %p79 = por %p77, %p78
      %s81 = sadd.s32 %s80, 1
      %p84 = scmp.eq.s32.totalorder %s25, 1
      %p85 = scmp.ne.s32.totalorder %s80, %s82
      %p86 = scmp.eq.s32.totalorder %s25, 0
      %p87 = por %p85, %p86
      %p88 = scmp.ne.s32.totalorder %s80, %s82
      %p89 = scmp.eq.s32.totalorder %s30, 1
      %p90 = por %p88, %p89
      %p91 = scmp.ne.s32.totalorder %s82, %s83
      %p92 = scmp.eq.s32.totalorder %s30, 0
      %p93 = por %p91, %p92
      %p94 = scmp.ne.s32.totalorder %s82, %s83
      %p95 = scmp.eq.s32.totalorder %s31, 1
      %p96 = por %p94, %p95
      %p98 = scmp.ne.s32.totalorder %s83, %s97
      %p99 = scmp.eq.s32.totalorder %s31, 0
      %p100 = por %p98, %p99
      %s102 = sadd.s32 %s101, 1
      %p105 = scmp.eq.s32.totalorder %s25, 1
      %p106 = scmp.ne.s32.totalorder %s101, %s103
      %p107 = scmp.eq.s32.totalorder %s25, 0
      %p108 = por %p106, %p107
      %p109 = scmp.ne.s32.totalorder %s101, %s103
      %p110 = scmp.eq.s32.totalorder %s30, 1
      %p111 = por %p109, %p110
      %p112 = scmp.ne.s32.totalorder %s103, %s104
      %p113 = scmp.eq.s32.totalorder %s30, 0
      %p114 = por %p112, %p113
      %p115 = scmp.ne.s32.totalorder %s103, %s104
      %p116 = scmp.eq.s32.totalorder %s31, 1
      %p117 = por %p115, %p116
      %p119 = scmp.ne.s32.totalorder %s104, %s118
      %p120 = scmp.eq.s32.totalorder %s31, 0
      %p121 = por %p119, %p120
      %s123 = sadd.s32 %s122, 1
      %p126 = scmp.eq.s32.totalorder %s25, 1
      %p127 = scmp.ne.s32.totalorder %s122, %s124
      %p128 = scmp.eq.s32.totalorder %s25, 0
      %p129 = por %p127, %p128
      %p130 = scmp.ne.s32.totalorder %s122, %s124
      %p131 = scmp.eq.s32.totalorder %s30, 1
      %p132 = por %p130, %p131
      %p133 = scmp.ne.s32.totalorder %s124, %s125
      %p134 = scmp.eq.s32.totalorder %s30, 0
      %p135 = por %p133, %p134
      %p136 = scmp.ne.s32.totalorder %s124, %s125
      %p137 = scmp.eq.s32.totalorder %s31, 1
      %p138 = por %p136, %p137
      %p140 = scmp.ne.s32.totalorder %s125, %s139
      %p141 = scmp.eq.s32.totalorder %s31, 0
      %p142 = por %p140, %p141
      %s144 = sadd.s32 %s143, 1
      %p147 = scmp.eq.s32.totalorder %s25, 1
      %p148 = scmp.ne.s32.totalorder %s143, %s145
      %p149 = scmp.eq.s32.totalorder %s25, 0
      %p150 = por %p148, %p149
      %p151 = scmp.ne.s32.totalorder %s143, %s145
      %p152 = scmp.eq.s32.totalorder %s30, 1
      %p153 = por %p151, %p152
      %p154 = scmp.ne.s32.totalorder %s145, %s146
      %p155 = scmp.eq.s32.totalorder %s30, 0
      %p156 = por %p154, %p155
      %p157 = scmp.ne.s32.totalorder %s145, %s146
      %p158 = scmp.eq.s32.totalorder %s31, 1
      %p159 = por %p157, %p158
      %p161 = scmp.ne.s32.totalorder %s146, %s160
      %p162 = scmp.eq.s32.totalorder %s31, 0
      %p163 = por %p161, %p162
      %s164 = ssub.s32 %s25, %s32
      %p165 = scmp.eq.s32.totalorder %s164, 0
      %s167 = sadd.s32 %s166, 1
      %s168 = scalar_select %p165, %s166, %s167
      %p171 = pneg %p165
      %p172 = scmp.eq.s32.totalorder %s25, 1
      %p173 = por %p171, %p172
      %p174 = scmp.ne.s32.totalorder %s166, %s169
      %p175 = scmp.eq.s32.totalorder %s25, 0
      %p176 = por %p174, %p175
      %p177 = scmp.ne.s32.totalorder %s166, %s169
      %p178 = scmp.eq.s32.totalorder %s30, 1
      %p179 = por %p177, %p178
      %p180 = scmp.ne.s32.totalorder %s169, %s170
      %p181 = scmp.eq.s32.totalorder %s30, 0
      %p182 = por %p180, %p181
      %p183 = scmp.ne.s32.totalorder %s169, %s170
      %p184 = scmp.eq.s32.totalorder %s31, 1
      %p185 = por %p183, %p184
      %p187 = scmp.ne.s32.totalorder %s170, %s186
      %p188 = scmp.eq.s32.totalorder %s31, 0
      %p189 = por %p187, %p188
      %s190 = ssub.s32 %s25, %s32
      %p191 = scmp.eq.s32.totalorder %s190, 0
      %s193 = sadd.s32 %s192, 1
      %s194 = scalar_select %p191, %s192, %s193
      %p197 = pneg %p191
      %p198 = scmp.eq.s32.totalorder %s25, 1
      %p199 = por %p197, %p198
      %p200 = scmp.ne.s32.totalorder %s192, %s195
      %p201 = scmp.eq.s32.totalorder %s25, 0
      %p202 = por %p200, %p201
      %p203 = scmp.ne.s32.totalorder %s192, %s195
      %p204 = scmp.eq.s32.totalorder %s30, 1
      %p205 = por %p203, %p204
      %p206 = scmp.ne.s32.totalorder %s195, %s196
      %p207 = scmp.eq.s32.totalorder %s30, 0
      %p208 = por %p206, %p207
      %p209 = scmp.ne.s32.totalorder %s195, %s196
      %p210 = scmp.eq.s32.totalorder %s31, 1
      %p211 = por %p209, %p210
      %p213 = scmp.ne.s32.totalorder %s196, %s212
      %p214 = scmp.eq.s32.totalorder %s31, 0
      %p215 = por %p213, %p214
      %p216 = scmp.le.s32.totalorder 1, %s25
      %p217 = scmp.lt.s32.totalorder %s25, 3
      %p218 = pnand %p216, %p217
      %p219 = pneg %p218
      // Predicated region
      $region9: #{tpu_custom_call.1} parent=5 // pred_check
        _
      $region10: #{tpu_custom_call.1} parent=5 // pred_check_branch
        %221 = sbr.rel (%p218) target = $region12
      $region11: #{tpu_custom_call.1} parent=5 // pred_region
        %s222 = ssub.s32 %s25, 1
        // Predicated region
        $region13: #{tpu_custom_call.1} parent=11 // pred_check
          %p223 = pneg %p72
        $region14: #{tpu_custom_call.1} parent=11 // pred_check_branch
          %225 = sbr.rel (%p223) target = $region16
        $region15: #{tpu_custom_call.1} parent=11 // pred_region
          %s227 = ssub.s32 4096, 4096
          %228 = vsyncadd [#allocation6], %s227
          %s229 = sshll.u32 [#allocation5], 4
          %s230 = int_to_ptr.vmem [resolvable:$true] %s229
          %235 = dma.hbm_to_vmem [thread:$0]  %s1, 4096, %s230, [#allocation6], 256, 256, 16
        $region16: #{tpu_custom_call.1} parent=11 // pred_fallthru
          _
        // Predicated region
        $region17: #{tpu_custom_call.1} parent=11 // pred_check
          %p236 = pneg %p93
        $region18: #{tpu_custom_call.1} parent=11 // pred_check_branch
          %238 = sbr.rel (%p236) target = $region20
        $region19: #{tpu_custom_call.1} parent=11 // pred_region
          %s240 = ssub.s32 256, 256
          %241 = vsyncadd [#allocation6], %s240
          %s243 = sshll.u32 [#allocation7], 4
          %s244 = int_to_ptr.vmem [resolvable:$true] %s243
          %246 = dma.hbm_to_vmem [thread:$0]  %s2, 256, %s244, [#allocation6]
        $region20: #{tpu_custom_call.1} parent=11 // pred_fallthru
          _
        // Predicated region
        $region21: #{tpu_custom_call.1} parent=11 // pred_check
          %p247 = pneg %p114
        $region22: #{tpu_custom_call.1} parent=11 // pred_check_branch
          %249 = sbr.rel (%p247) target = $region24
        $region23: #{tpu_custom_call.1} parent=11 // pred_region
          %s251 = ssub.s32 2048, 2048
          %252 = vsyncadd [#allocation9], %s251
          %s253 = sshll.u32 [#allocation8], 4
          %s254 = int_to_ptr.vmem [resolvable:$true] %s253
          %259 = dma.hbm_to_vmem [thread:$0]  %s3, 2048, %s254, [#allocation9], 64, 64, 4
        $region24: #{tpu_custom_call.1} parent=11 // pred_fallthru
          _
        // Predicated region
        $region25: #{tpu_custom_call.1} parent=11 // pred_check
          %p260 = pneg %p135
        $region26: #{tpu_custom_call.1} parent=11 // pred_check_branch
          %262 = sbr.rel (%p260) target = $region28
        $region27: #{tpu_custom_call.1} parent=11 // pred_region
          %s264 = ssub.s32 2048, 2048
          %265 = vsyncadd [#allocation9], %s264
          %s266 = sshll.u32 [#allocation10], 4
          %s267 = int_to_ptr.vmem [resolvable:$true] %s266
          %272 = dma.hbm_to_vmem [thread:$0]  %s4, 2048, %s267, [#allocation9], 64, 64, 4
        $region28: #{tpu_custom_call.1} parent=11 // pred_fallthru
          _
        // Predicated region
        $region29: #{tpu_custom_call.1} parent=11 // pred_check
          %p273 = pneg %p156
        $region30: #{tpu_custom_call.1} parent=11 // pred_check_branch
          %275 = sbr.rel (%p273) target = $region32
        $region31: #{tpu_custom_call.1} parent=11 // pred_region
          _
        $region32: #{tpu_custom_call.1} parent=11 // pred_fallthru
          _
      $region12: #{tpu_custom_call.1} parent=5 // pred_fallthru
        _
      %p276 = scmp.lt.s32.totalorder %s25, 2
      // Predicated region
      $region33: #{tpu_custom_call.1} parent=5 // pred_check
        %p277 = pneg %p276
      $region34: #{tpu_custom_call.1} parent=5 // pred_check_branch
        %279 = sbr.rel (%p277) target = $region36
      $region35: #{tpu_custom_call.1} parent=5 // pred_region
        // Predicated region
        $region37: #{tpu_custom_call.1} parent=35 // pred_check
          %p280 = pneg %p45
        $region38: #{tpu_custom_call.1} parent=35 // pred_check_branch
          %282 = sbr.rel (%p280) target = $region40
        $region39: #{tpu_custom_call.1} parent=35 // pred_region
          %s283 = sand.u32 %s35, 1
          %s284 = scalar_lea.sflag [#allocation3], %s283
          %s285 = sand.u32 %s35, 1
          %s286 = smul.addr %s285, 4
          %s287 = scalar_lea.vmem [#allocation2], %s286
          %s289 = ssub.s32 64, 64
          %290 = vsyncadd %s284, %s289
          %s291 = smul.addr %s25, 64
          %s292 = scalar_lea.hbm %s0, %s291
          %s294 = sshll.u32 %s287, 4
          %s295 = int_to_ptr.vmem [resolvable:$true] %s294
          %297 = dma.hbm_to_vmem [thread:$0]  %s292, 64, %s295, %s284
        $region40: #{tpu_custom_call.1} parent=35 // pred_fallthru
          _
      $region36: #{tpu_custom_call.1} parent=5 // pred_fallthru
        _
      %p298 = scmp.le.s32.totalorder 1, %s25
      %p299 = scmp.lt.s32.totalorder %s25, 3
      %p300 = pnand %p298, %p299
      %p301 = pneg %p300
      // Predicated region
      $region41: #{tpu_custom_call.1} parent=5 // pred_check
        _
      $region42: #{tpu_custom_call.1} parent=5 // pred_check_branch
        %303 = sbr.rel (%p300) target = $region44
      $region43: #{tpu_custom_call.1} parent=5 // pred_region
        %s304 = ssub.s32 %s25, 1
        %s305 = sand.u32 %s38, 1
        %s306 = scalar_lea.sflag [#allocation3], %s305
        %s307 = sand.u32 %s38, 1
        %s308 = smul.addr %s307, 4
        %s309 = scalar_lea.vmem [#allocation2], %s308
        // Predicated region
        $region45: #{tpu_custom_call.1} parent=43 // pred_check
          %p310 = pneg %p51
        $region46: #{tpu_custom_call.1} parent=43 // pred_check_branch
          %312 = sbr.rel (%p310) target = $region48
        $region47: #{tpu_custom_call.1} parent=43 // pred_region
          %313 = dma.done %s306, 64
        $region48: #{tpu_custom_call.1} parent=43 // pred_fallthru
          _
        // Predicated region
        $region49: #{tpu_custom_call.1} parent=43 // pred_check
          %p314 = pneg %p72
        $region50: #{tpu_custom_call.1} parent=43 // pred_check_branch
          %316 = sbr.rel (%p314) target = $region52
        $region51: #{tpu_custom_call.1} parent=43 // pred_region
          %317 = dma.done [#allocation6], 4096
        $region52: #{tpu_custom_call.1} parent=43 // pred_fallthru
          _
        // Predicated region
        $region53: #{tpu_custom_call.1} parent=43 // pred_check
          %p318 = pneg %p93
        $region54: #{tpu_custom_call.1} parent=43 // pred_check_branch
          %320 = sbr.rel (%p318) target = $region56
        $region55: #{tpu_custom_call.1} parent=43 // pred_region
          %321 = dma.done [#allocation6], 256
        $region56: #{tpu_custom_call.1} parent=43 // pred_fallthru
          _
        // Predicated region
        $region57: #{tpu_custom_call.1} parent=43 // pred_check
          %p322 = pneg %p114
        $region58: #{tpu_custom_call.1} parent=43 // pred_check_branch
          %324 = sbr.rel (%p322) target = $region60
        $region59: #{tpu_custom_call.1} parent=43 // pred_region
          %325 = dma.done [#allocation9], 2048
        $region60: #{tpu_custom_call.1} parent=43 // pred_fallthru
          _
        // Predicated region
        $region61: #{tpu_custom_call.1} parent=43 // pred_check
          %p326 = pneg %p135
        $region62: #{tpu_custom_call.1} parent=43 // pred_check_branch
          %328 = sbr.rel (%p326) target = $region64
        $region63: #{tpu_custom_call.1} parent=43 // pred_region
          %329 = dma.done [#allocation9], 2048
        $region64: #{tpu_custom_call.1} parent=43 // pred_fallthru
          _
        %s330 = sand.u32 %s38, 1
        %s331 = scalar_lea.sflag [#allocation3], %s330
        %s332 = sand.u32 %s38, 1
        %s333 = smul.addr %s332, 4
        %s334 = scalar_lea.vmem [#allocation2], %s333
        %p335 = pneg %p51
        %p336 = pneg %p48
        %p337 = pneg %p72
        %p338 = pneg %p69
        %p339 = pneg %p93
        %p340 = pneg %p90
        %p341 = pneg %p114
        %p342 = pneg %p111
        %p343 = pneg %p135
        %p344 = pneg %p132
        %p345 = pneg %p156
        %p346 = pneg %p153
        %p347 = pneg %p182
        %p348 = pneg %p179
        %s349 = sand.u32 %s169, 1
        %s350 = scalar_lea.sflag [#allocation4], %s349
        %s351 = sand.u32 %s169, 1
        %s352 = smul.addr %s351, 8
        %s353 = scalar_lea.vmem [#allocation11], %s352
        %p354 = pneg %p208
        %p355 = pneg %p205
        %s356 = sand.u32 %s195, 1
        %s357 = scalar_lea.sflag [#allocation13], %s356
        %s358 = sand.u32 %s195, 1
        %s359 = smul.addr %s358, 8
        %s360 = scalar_lea.vmem [#allocation12], %s359
        %v362 = vld [vmem:[%s309] sm:$0xf]
        %v363 = vld [vmem:[#allocation5] sm:$0xff]
        %v364 = vld [vmem:[#allocation5 + $0x8] sm:$0xff]
        %v365 = vld [vmem:[#allocation5 + $0x10] sm:$0xff]
        %v366 = vld [vmem:[#allocation5 + $0x18] sm:$0xff]
        %v367 = vld [vmem:[#allocation5 + $0x20] sm:$0xff]
        %v368 = vld [vmem:[#allocation5 + $0x28] sm:$0xff]
        %v369 = vld [vmem:[#allocation5 + $0x30] sm:$0xff]
        %v370 = vld [vmem:[#allocation5 + $0x38] sm:$0xff]
        %v371 = vld [vmem:[#allocation5 + $0x40] sm:$0xff]
        %v372 = vld [vmem:[#allocation5 + $0x48] sm:$0xff]
        %v373 = vld [vmem:[#allocation5 + $0x50] sm:$0xff]
        %v374 = vld [vmem:[#allocation5 + $0x58] sm:$0xff]
        %v375 = vld [vmem:[#allocation5 + $0x60] sm:$0xff]
        %v376 = vld [vmem:[#allocation5 + $0x68] sm:$0xff]
        %v377 = vld [vmem:[#allocation5 + $0x70] sm:$0xff]
        %v378 = vld [vmem:[#allocation5 + $0x78] sm:$0xff]
        %v379 = vld [vmem:[#allocation5 + $0x80] sm:$0xff]
        %v380 = vld [vmem:[#allocation5 + $0x88] sm:$0xff]
        %v381 = vld [vmem:[#allocation5 + $0x90] sm:$0xff]
        %v382 = vld [vmem:[#allocation5 + $0x98] sm:$0xff]
        %v383 = vld [vmem:[#allocation5 + $0xa0] sm:$0xff]
        %v384 = vld [vmem:[#allocation5 + $0xa8] sm:$0xff]
        %v385 = vld [vmem:[#allocation5 + $0xb0] sm:$0xff]
        %v386 = vld [vmem:[#allocation5 + $0xb8] sm:$0xff]
        %v387 = vld [vmem:[#allocation5 + $0xc0] sm:$0xff]
        %v388 = vld [vmem:[#allocation5 + $0xc8] sm:$0xff]
        %v389 = vld [vmem:[#allocation5 + $0xd0] sm:$0xff]
        %v390 = vld [vmem:[#allocation5 + $0xd8] sm:$0xff]
        %v391 = vld [vmem:[#allocation5 + $0xe0] sm:$0xff]
        %v392 = vld [vmem:[#allocation5 + $0xe8] sm:$0xff]
        %v393 = vld [vmem:[#allocation5 + $0xf0] sm:$0x33]
        %v394 = vld [vmem:[#allocation5 + $0xf8] sm:$0x33]
        %v395 = vld [vmem:[#allocation7] ss:$4 sm:$0xf]
        %v397 = vlaneseq
        %v398 = vshrl.u32 %v397, 7
        %v399 = vsub.s32 0, %v398
        %v400 = vrot.slane %v395, %v399
        %v401 = vlaneseq
        %v402 = vshrl.u32 %v401, 7
        %v403 = vsub.s32 1, %v402
        %v404 = vrot.slane %v395, %v403
        %v405 = vlaneseq
        %v406 = vshrl.u32 %v405, 7
        %v407 = vsub.s32 2, %v406
        %v408 = vrot.slane %v395, %v407
        %v409 = vlaneseq
        %v410 = vshrl.u32 %v409, 7
        %v411 = vsub.s32 3, %v410
        %v412 = vrot.slane %v395, %v411
        %v449 = vunpack.c.l.b16 %v363
        %v450 = vunpack.c.h.b16 %v363
        %v451 = vunpack.c.l.b16 %v364
        %v452 = vunpack.c.h.b16 %v364
        %v453 = vunpack.c.l.b16 %v365
        %v454 = vunpack.c.h.b16 %v365
        %v455 = vunpack.c.l.b16 %v366
        %v456 = vunpack.c.h.b16 %v366
        %v457 = vunpack.c.l.b16 %v367
        %v458 = vunpack.c.h.b16 %v367
        %v459 = vunpack.c.l.b16 %v368
        %v460 = vunpack.c.h.b16 %v368
        %v461 = vunpack.c.l.b16 %v369
        %v462 = vunpack.c.h.b16 %v369
        %v463 = vunpack.c.l.b16 %v370
        %v464 = vunpack.c.h.b16 %v370
        %v465 = vunpack.c.l.b16 %v371
        %v466 = vunpack.c.h.b16 %v371
        %v467 = vunpack.c.l.b16 %v372
        %v468 = vunpack.c.h.b16 %v372
        %v469 = vunpack.c.l.b16 %v373
        %v470 = vunpack.c.h.b16 %v373
        %v471 = vunpack.c.l.b16 %v374
        %v472 = vunpack.c.h.b16 %v374
        %v473 = vunpack.c.l.b16 %v375
        %v474 = vunpack.c.h.b16 %v375
        %v475 = vunpack.c.l.b16 %v376
        %v476 = vunpack.c.h.b16 %v376
        %v477 = vunpack.c.l.b16 %v377
        %v478 = vunpack.c.h.b16 %v377
        %v479 = vunpack.c.l.b16 %v378
        %v480 = vunpack.c.h.b16 %v378
        %v481 = vunpack.c.l.b16 %v379
        %v482 = vunpack.c.h.b16 %v379
        %v483 = vunpack.c.l.b16 %v380
        %v484 = vunpack.c.h.b16 %v380
        %v485 = vunpack.c.l.b16 %v381
        %v486 = vunpack.c.h.b16 %v381
        %v487 = vunpack.c.l.b16 %v382
        %v488 = vunpack.c.h.b16 %v382
        %v489 = vunpack.c.l.b16 %v383
        %v490 = vunpack.c.h.b16 %v383
        %v491 = vunpack.c.l.b16 %v384
        %v492 = vunpack.c.h.b16 %v384
        %v493 = vunpack.c.l.b16 %v385
        %v494 = vunpack.c.h.b16 %v385
        %v495 = vunpack.c.l.b16 %v386
        %v496 = vunpack.c.h.b16 %v386
        %v497 = vunpack.c.l.b16 %v387
        %v498 = vunpack.c.h.b16 %v387
        %v499 = vunpack.c.l.b16 %v388
        %v500 = vunpack.c.h.b16 %v388
        %v501 = vunpack.c.l.b16 %v389
        %v502 = vunpack.c.h.b16 %v389
        %v503 = vunpack.c.l.b16 %v390
        %v504 = vunpack.c.h.b16 %v390
        %v505 = vunpack.c.l.b16 %v391
        %v506 = vunpack.c.h.b16 %v391
        %v507 = vunpack.c.l.b16 %v392
        %v508 = vunpack.c.h.b16 %v392
        %v509 = vunpack.c.l.b16 %v393
        %v510 = vunpack.c.h.b16 %v393
        %v511 = vunpack.c.l.b16 %v394
        %v512 = vunpack.c.h.b16 %v394
        %v513 = vpack.c.b16 %v453, %v449
        %v514 = vpack.c.b16 %v454, %v450
        %v515 = vpack.c.b16 %v455, %v451
        %v516 = vpack.c.b16 %v456, %v452
        %v517 = vpack.c.b16 %v461, %v457
        %v518 = vpack.c.b16 %v462, %v458
        %v519 = vpack.c.b16 %v463, %v459
        %v520 = vpack.c.b16 %v464, %v460
        %v521 = vpack.c.b16 %v469, %v465
        %v522 = vpack.c.b16 %v470, %v466
        %v523 = vpack.c.b16 %v471, %v467
        %v524 = vpack.c.b16 %v472, %v468
        %v525 = vpack.c.b16 %v477, %v473
        %v526 = vpack.c.b16 %v478, %v474
        %v527 = vpack.c.b16 %v479, %v475
        %v528 = vpack.c.b16 %v480, %v476
        %v529 = vpack.c.b16 %v485, %v481
        %v530 = vpack.c.b16 %v486, %v482
        %v531 = vpack.c.b16 %v487, %v483
        %v532 = vpack.c.b16 %v488, %v484
        %v533 = vpack.c.b16 %v493, %v489
        %v534 = vpack.c.b16 %v494, %v490
        %v535 = vpack.c.b16 %v495, %v491
        %v536 = vpack.c.b16 %v496, %v492
        %v537 = vpack.c.b16 %v501, %v497
        %v538 = vpack.c.b16 %v502, %v498
        %v539 = vpack.c.b16 %v503, %v499
        %v540 = vpack.c.b16 %v504, %v500
        %v541 = vpack.c.b16 %v509, %v505
        %v542 = vpack.c.b16 %v510, %v506
        %v543 = vpack.c.b16 %v511, %v507
        %v544 = vpack.c.b16 %v512, %v508
        %vm573 = vcmask 1014784
        %v575 = vsel %vm573, %v362, 0
        %vm577 = vcmask 1045504
        %v579 = vsel %vm577, %v541, 0
        %v582 = vsel %vm577, %v542, 0
        %v585 = vsel %vm577, %v543, 0
        %v588 = vsel %vm577, %v544, 0
        %590 = vmatprep.subr.bf16.mxu0 %v514
        %591 = vmatpush1.bf16.msra.mxu0 %v513
        %592 = vmatprep.subr.bf16.mxu0 %v518
        %593 = vmatpush1.bf16.msra.mxu0 %v517
        %594 = vmatprep.subr.bf16.mxu0 %v522
        %595 = vmatpush1.bf16.msra.mxu0 %v521
        %596 = vmatprep.subr.bf16.mxu0 %v526
        %597 = vmatpush1.bf16.msra.mxu0 %v525
        %598 = vmatprep.subr.bf16.mxu0 %v530
        %599 = vmatpush1.bf16.msra.mxu0 %v529
        %600 = vmatprep.subr.bf16.mxu0 %v534
        %601 = vmatpush1.bf16.msra.mxu0 %v533
        %602 = vmatprep.subr.bf16.mxu0 %v538
        %603 = vmatpush1.bf16.msra.mxu0 %v537
        %604 = vmatprep.subr.bf16.mxu0 %v582
        %605 = vmatpush1.bf16.msra.mxu0 %v579
        %606 = vmatprep.subr.bf16.mxu0 0
        %607 = vmatpush1.bf16.msra.mxu0 0
        %608 = vmatprep.subr.bf16.mxu0 0
        %609 = vmatpush1.bf16.msra.mxu0 0
        %610 = vmatprep.subr.bf16.mxu0 0
        %611 = vmatpush1.bf16.msra.mxu0 0
        %612 = vmatprep.subr.bf16.mxu0 0
        %613 = vmatpush1.bf16.msra.mxu0 0
        %614 = vmatprep.subr.bf16.mxu0 0
        %615 = vmatpush1.bf16.msra.mxu0 0
        %616 = vmatprep.subr.bf16.mxu0 0
        %617 = vmatpush1.bf16.msra.mxu0 0
        %618 = vmatprep.subr.bf16.mxu0 0
        %619 = vmatpush1.bf16.msra.mxu0 0
        %620 = vmatprep.subr.bf16.mxu0 0
        %621 = vmatpush1.bf16.msra.mxu0 0
        %622 = vmatprep.mubr.bf16.mxu0 0
        %623 = vmatmul.mubr.bf16.gmra.mrb[0].mxu0 %v575
        %v624 = vpop.f32.mrb[0].mxu0
        %v625 = vadd.f32 %v400, %v624
        %v626 = vpop.f32.mrb[0].mxu0
        %v627 = vadd.f32 %v404, %v626
        %v628 = vpop.f32.mrb[0].mxu0
        %v629 = vpop.f32.mrb[0].mxu0
        %630 = vdwg.mxu0
        %631 = vmatprep.subr.bf16.mxu0 %v516
        %632 = vmatpush1.bf16.msra.mxu0 %v515
        %633 = vmatprep.subr.bf16.mxu0 %v520
        %634 = vmatpush1.bf16.msra.mxu0 %v519
        %635 = vmatprep.subr.bf16.mxu0 %v524
        %636 = vmatpush1.bf16.msra.mxu0 %v523
        %637 = vmatprep.subr.bf16.mxu0 %v528
        %638 = vmatpush1.bf16.msra.mxu0 %v527
        %639 = vmatprep.subr.bf16.mxu0 %v532
        %640 = vmatpush1.bf16.msra.mxu0 %v531
        %641 = vmatprep.subr.bf16.mxu0 %v536
        %642 = vmatpush1.bf16.msra.mxu0 %v535
        %643 = vmatprep.subr.bf16.mxu0 %v540
        %644 = vmatpush1.bf16.msra.mxu0 %v539
        %645 = vmatprep.subr.bf16.mxu0 %v588
        %646 = vmatpush1.bf16.msra.mxu0 %v585
        %647 = vmatprep.subr.bf16.mxu0 0
        %648 = vmatpush1.bf16.msra.mxu0 0
        %649 = vmatprep.subr.bf16.mxu0 0
        %650 = vmatpush1.bf16.msra.mxu0 0
        %651 = vmatprep.subr.bf16.mxu0 0
        %652 = vmatpush1.bf16.msra.mxu0 0
        %653 = vmatprep.subr.bf16.mxu0 0
        %654 = vmatpush1.bf16.msra.mxu0 0
        %655 = vmatprep.subr.bf16.mxu0 0
        %656 = vmatpush1.bf16.msra.mxu0 0
        %657 = vmatprep.subr.bf16.mxu0 0
        %658 = vmatpush1.bf16.msra.mxu0 0
        %659 = vmatprep.subr.bf16.mxu0 0
        %660 = vmatpush1.bf16.msra.mxu0 0
        %661 = vmatprep.subr.bf16.mxu0 0
        %662 = vmatpush1.bf16.msra.mxu0 0
        %663 = vmatprep.mubr.bf16.mxu0 0
        %664 = vmatmul.mubr.bf16.gmra.mrb[0].mxu0 %v575
        %v665 = vpop.f32.mrb[0].mxu0
        %v666 = vadd.f32 %v408, %v665
        %v667 = vpop.f32.mrb[0].mxu0
        %v668 = vadd.f32 %v412, %v667
        %v669 = vpop.f32.mrb[0].mxu0
        %v670 = vpop.f32.mrb[0].mxu0
        %671 = vdwg.mxu0
        %v672 = vlaneseq
        %v673 = vand.u32 %v672, 127
        %v674 = vadd.s32 %v673, 128
        %v675 = vadd.s32 %v673, 256
        %v676 = vadd.s32 %v673, 384
        %vm677 = vcmp.lt.s32.totalorder %v673, 256
        %vm678 = vcmp.lt.s32.totalorder %v674, 256
        %vm679 = vcmp.lt.s32.totalorder %v675, 256
        %vm680 = vcmp.lt.s32.totalorder %v676, 256
        %v681 = vadd.f32 %v625, %v627
        %682 = vadd.xlane.f32.xlu0 %v681
        %v683 = vpop.xlane.xlu0 %682
        %v684 = vmul.f32 %v683, 0.0052083335
        %v685 = vadd.f32 %v666, %v668
        %686 = vadd.xlane.f32.xlu0 %v685
        %v687 = vpop.xlane.xlu0 %686
        %v688 = vmul.f32 %v687, 0.0052083335
        %v689 = vsel %vm677, 1, 0
        %v690 = vsel %vm678, 1, 0
        %v691 = vsel %vm679, 1, 0
        %v692 = vsel %vm680, 1, 0
        %vm693 = vcmp.eq.s32.totalorder %v689, 1
        %vm694 = vcmp.eq.s32.totalorder %v690, 1
        %vm695 = vcmp.eq.s32.totalorder %v691, 1
        %vm696 = vcmp.eq.s32.totalorder %v692, 1
        %v697 = vsel %vm693, %v684, %v688
        %v698 = vsel %vm694, %v684, %v688
        %v699 = vsel %vm695, %v684, %v688
        %v700 = vsel %vm696, %v684, %v688
        %v701 = vsub.f32 %v625, %v697
        %v702 = vsub.f32 %v627, %v698
        %v703 = vsub.f32 %v666, %v699
        %v704 = vsub.f32 %v668, %v700
        %vm705 = vcmp.lt.s32.totalorder %v673, 192
        %vm706 = vcmp.lt.s32.totalorder %v674, 192
        %vm707 = vcmp.lt.s32.totalorder %v675, 192
        %vm708 = vcmp.lt.s32.totalorder %v676, 192
        %vm709 = vcmp.ge.s32.totalorder %v673, 256
        %vm710 = vcmp.ge.s32.totalorder %v674, 256
        %vm711 = vcmp.ge.s32.totalorder %v675, 256
        %vm712 = vcmp.ge.s32.totalorder %v676, 256
        %vm713 = vcmp.lt.s32.totalorder %v673, 448
        %vm714 = vcmp.lt.s32.totalorder %v674, 448
        %vm715 = vcmp.lt.s32.totalorder %v675, 448
        %vm716 = vcmp.lt.s32.totalorder %v676, 448
        %vm717 = vmand %vm709, %vm713
        %vm718 = vmand %vm710, %vm714
        %vm719 = vmand %vm711, %vm715
        %vm720 = vmand %vm712, %vm716
        %vm721 = vmor %vm705, %vm717
        %vm722 = vmor %vm706, %vm718
        %vm723 = vmor %vm707, %vm719
        %vm724 = vmor %vm708, %vm720
        %v725 = vsel %vm721, 1, 0
        %v726 = vsel %vm722, 1, 0
        %v727 = vsel %vm723, 1, 0
        %v728 = vsel %vm724, 1, 0
        %vm729 = vcmp.eq.s32.totalorder %v725, 1
        %vm730 = vcmp.eq.s32.totalorder %v726, 1
        %vm731 = vcmp.eq.s32.totalorder %v727, 1
        %vm732 = vcmp.eq.s32.totalorder %v728, 1
        %v733 = vsel %vm729, %v701, 0.0
        %v734 = vsel %vm730, %v702, 0.0
        %v735 = vsel %vm731, %v703, 0.0
        %v736 = vsel %vm732, %v704, 0.0
        %v737 = vmul.f32 %v733, %v733
        %v738 = vmul.f32 %v734, %v734
        %v739 = vadd.f32 %v737, %v738
        %740 = vadd.xlane.f32.xlu0 %v739
        %v741 = vpop.xlane.xlu0 %740
        %v742 = vmul.f32 %v741, 0.0052083335
        %v743 = vmul.f32 %v735, %v735
        %v744 = vmul.f32 %v736, %v736
        %v745 = vadd.f32 %v743, %v744
        %746 = vadd.xlane.f32.xlu0 %v745
        %v747 = vpop.xlane.xlu0 %746
        %v748 = vmul.f32 %v747, 0.0052083335
        %v749 = vadd.f32 %v742, 1e-05
        %v750 = vrsqrt.pop %v749
        %v751 = vadd.f32 %v748, 1e-05
        %v752 = vrsqrt.pop %v751
        %v753 = vsel %vm693, %v750, %v752
        %v754 = vsel %vm694, %v750, %v752
        %v755 = vsel %vm695, %v750, %v752
        %v756 = vsel %vm696, %v750, %v752
        %v757 = vmul.f32 %v733, %v753
        %v758 = vmul.f32 %v734, %v754
        %v759 = vmul.f32 %v735, %v755
        %v760 = vmul.f32 %v736, %v756
        %s761 = scalar_lea.vmem [#allocation7], 1
        %v762 = vld [vmem:[%s761] ss:$4 sm:$0xf]
        %v764 = vlaneseq
        %v765 = vshrl.u32 %v764, 7
        %v766 = vsub.s32 0, %v765
        %v767 = vrot.slane %v762, %v766
        %v768 = vlaneseq
        %v769 = vshrl.u32 %v768, 7
        %v770 = vsub.s32 1, %v769
        %v771 = vrot.slane %v762, %v770
        %v772 = vlaneseq
        %v773 = vshrl.u32 %v772, 7
        %v774 = vsub.s32 2, %v773
        %v775 = vrot.slane %v762, %v774
        %v776 = vlaneseq
        %v777 = vshrl.u32 %v776, 7
        %v778 = vsub.s32 3, %v777
        %v779 = vrot.slane %v762, %v778
        %v784 = vmul.f32 %v757, %v767
        %v785 = vmul.f32 %v758, %v771
        %v786 = vmul.f32 %v759, %v775
        %v787 = vmul.f32 %v760, %v779
        %s788 = scalar_lea.vmem [#allocation7], 2
        %v789 = vld [vmem:[%s788] ss:$4 sm:$0xf]
        %v791 = vlaneseq
        %v792 = vshrl.u32 %v791, 7
        %v793 = vsub.s32 0, %v792
        %v794 = vrot.slane %v789, %v793
        %v795 = vlaneseq
        %v796 = vshrl.u32 %v795, 7
        %v797 = vsub.s32 1, %v796
        %v798 = vrot.slane %v789, %v797
        %v799 = vlaneseq
        %v800 = vshrl.u32 %v799, 7
        %v801 = vsub.s32 2, %v800
        %v802 = vrot.slane %v789, %v801
        %v803 = vlaneseq
        %v804 = vshrl.u32 %v803, 7
        %v805 = vsub.s32 3, %v804
        %v806 = vrot.slane %v789, %v805
        %v811 = vadd.f32 %v784, %v794
        %v812 = vadd.f32 %v785, %v798
        %v813 = vadd.f32 %v786, %v802
        %v814 = vadd.f32 %v787, %v806
        %v815 = vmax.f32 %v811, 0.0
        %v816 = vmax.f32 %v812, 0.0
        %v817 = vmax.f32 %v813, 0.0
        %v818 = vmax.f32 %v814, 0.0
        %v819 = vpack.c.bf16 %v815, %v815
        %v820 = vpack.c.bf16 %v816, %v816
        %v821 = vpack.c.bf16 %v817, %v817
        %v822 = vpack.c.bf16 %v818, %v818
        %v823 = vld [vmem:[#allocation8] sm:$0xf]
        %v824 = vld [vmem:[#allocation8 + $0x4] sm:$0xf]
        %v825 = vld [vmem:[#allocation8 + $0x8] sm:$0xf]
        %v826 = vld [vmem:[#allocation8 + $0xc] sm:$0xf]
        %v827 = vld [vmem:[#allocation8 + $0x10] sm:$0xf]
        %v828 = vld [vmem:[#allocation8 + $0x14] sm:$0xf]
        %v829 = vld [vmem:[#allocation8 + $0x18] sm:$0xf]
        %v830 = vld [vmem:[#allocation8 + $0x1c] sm:$0xf]
        %v831 = vld [vmem:[#allocation8 + $0x20] sm:$0xf]
        %v832 = vld [vmem:[#allocation8 + $0x24] sm:$0xf]
        %v833 = vld [vmem:[#allocation8 + $0x28] sm:$0xf]
        %v834 = vld [vmem:[#allocation8 + $0x2c] sm:$0xf]
        %v835 = vld [vmem:[#allocation8 + $0x30] sm:$0xf]
        %v836 = vld [vmem:[#allocation8 + $0x34] sm:$0xf]
        %v837 = vld [vmem:[#allocation8 + $0x38] sm:$0xf]
        %v838 = vld [vmem:[#allocation8 + $0x3c] sm:$0xf]
        %v839 = vld [vmem:[#allocation8 + $0x40] sm:$0xf]
        %v840 = vld [vmem:[#allocation8 + $0x44] sm:$0xf]
        %v841 = vld [vmem:[#allocation8 + $0x48] sm:$0xf]
        %v842 = vld [vmem:[#allocation8 + $0x4c] sm:$0xf]
        %v843 = vld [vmem:[#allocation8 + $0x50] sm:$0xf]
        %v844 = vld [vmem:[#allocation8 + $0x54] sm:$0xf]
        %v845 = vld [vmem:[#allocation8 + $0x58] sm:$0xf]
        %v846 = vld [vmem:[#allocation8 + $0x5c] sm:$0xf]
        %v847 = vld [vmem:[#allocation8 + $0x60] sm:$0xf]
        %v848 = vld [vmem:[#allocation8 + $0x64] sm:$0xf]
        %v849 = vld [vmem:[#allocation8 + $0x68] sm:$0xf]
        %v850 = vld [vmem:[#allocation8 + $0x6c] sm:$0xf]
        %v851 = vld [vmem:[#allocation8 + $0x70] sm:$0xf]
        %v852 = vld [vmem:[#allocation8 + $0x74] sm:$0xf]
        %v853 = vld [vmem:[#allocation8 + $0x78] sm:$0xf]
        %v854 = vld [vmem:[#allocation8 + $0x7c] sm:$0xf]
        %v855 = vld [vmem:[%s5] sm:$0x1]
        %v856 = vlaneseq
        %v857 = vshrl.u32 %v856, 7
        %v858 = vsub.s32 0, %v857
        %v859 = vrot.slane %v855, %v858
        %v892 = vunpack.c.l.b16 %v823
        %v893 = vunpack.c.l.b16 %v824
        %v894 = vunpack.c.l.b16 %v825
        %v895 = vunpack.c.l.b16 %v826
        %v896 = vunpack.c.l.b16 %v827
        %v897 = vunpack.c.l.b16 %v828
        %v898 = vunpack.c.l.b16 %v829
        %v899 = vunpack.c.l.b16 %v830
        %v900 = vunpack.c.l.b16 %v831
        %v901 = vunpack.c.l.b16 %v832
        %v902 = vunpack.c.l.b16 %v833
        %v903 = vunpack.c.l.b16 %v834
        %v904 = vunpack.c.l.b16 %v835
        %v905 = vunpack.c.l.b16 %v836
        %v906 = vunpack.c.l.b16 %v837
        %v907 = vunpack.c.l.b16 %v838
        %v908 = vunpack.c.l.b16 %v839
        %v909 = vunpack.c.l.b16 %v840
        %v910 = vunpack.c.l.b16 %v841
        %v911 = vunpack.c.l.b16 %v842
        %v912 = vunpack.c.l.b16 %v843
        %v913 = vunpack.c.l.b16 %v844
        %v914 = vunpack.c.l.b16 %v845
        %v915 = vunpack.c.l.b16 %v846
        %v916 = vunpack.c.l.b16 %v847
        %v917 = vunpack.c.l.b16 %v848
        %v918 = vunpack.c.l.b16 %v849
        %v919 = vunpack.c.l.b16 %v850
        %v920 = vunpack.c.l.b16 %v851
        %v921 = vunpack.c.l.b16 %v852
        %v922 = vunpack.c.l.b16 %v853
        %v923 = vunpack.c.l.b16 %v854
        %v924 = vpack.c.b16 %v893, %v892
        %v925 = vpack.c.b16 %v895, %v894
        %v926 = vpack.c.b16 %v897, %v896
        %v927 = vpack.c.b16 %v899, %v898
        %v928 = vpack.c.b16 %v901, %v900
        %v929 = vpack.c.b16 %v903, %v902
        %v930 = vpack.c.b16 %v905, %v904
        %v931 = vpack.c.b16 %v907, %v906
        %v932 = vpack.c.b16 %v909, %v908
        %v933 = vpack.c.b16 %v911, %v910
        %v934 = vpack.c.b16 %v913, %v912
        %v935 = vpack.c.b16 %v915, %v914
        %v936 = vpack.c.b16 %v917, %v916
        %v937 = vpack.c.b16 %v919, %v918
        %v938 = vpack.c.b16 %v921, %v920
        %v939 = vpack.c.b16 %v923, %v922
        %956 = vmatprep.subr.bf16.mxu0 0
        %957 = vmatpush1.bf16.msra.mxu0 %v924
        %958 = vmatprep.subr.bf16.mxu0 0
        %959 = vmatpush1.bf16.msra.mxu0 %v925
        %960 = vmatprep.subr.bf16.mxu0 0
        %961 = vmatpush1.bf16.msra.mxu0 %v926
        %962 = vmatprep.subr.bf16.mxu0 0
        %963 = vmatpush1.bf16.msra.mxu0 %v927
        %964 = vmatprep.subr.bf16.mxu0 0
        %965 = vmatpush1.bf16.msra.mxu0 %v928
        %966 = vmatprep.subr.bf16.mxu0 0
        %967 = vmatpush1.bf16.msra.mxu0 %v929
        %968 = vmatprep.subr.bf16.mxu0 0
        %969 = vmatpush1.bf16.msra.mxu0 %v930
        %970 = vmatprep.subr.bf16.mxu0 0
        %971 = vmatpush1.bf16.msra.mxu0 %v931
        %972 = vmatprep.subr.bf16.mxu0 0
        %973 = vmatpush1.bf16.msra.mxu0 %v932
        %974 = vmatprep.subr.bf16.mxu0 0
        %975 = vmatpush1.bf16.msra.mxu0 %v933
        %976 = vmatprep.subr.bf16.mxu0 0
        %977 = vmatpush1.bf16.msra.mxu0 %v934
        %978 = vmatprep.subr.bf16.mxu0 0
        %979 = vmatpush1.bf16.msra.mxu0 %v935
        %980 = vmatprep.subr.bf16.mxu0 0
        %981 = vmatpush1.bf16.msra.mxu0 %v936
        %982 = vmatprep.subr.bf16.mxu0 0
        %983 = vmatpush1.bf16.msra.mxu0 %v937
        %984 = vmatprep.subr.bf16.mxu0 0
        %985 = vmatpush1.bf16.msra.mxu0 %v938
        %986 = vmatprep.subr.bf16.mxu0 0
        %987 = vmatpush1.bf16.msra.mxu0 %v939
        %988 = vmatprep.mubr.bf16.mxu0 %v820
        %989 = vmatmul.mubr.bf16.gmra.mrb[0].mxu0 %v819
        %v990 = vpop.f32.mrb[0].mxu0
        %v991 = vadd.f32 %v859, %v990
        %v992 = vpop.f32.mrb[0].mxu0
        %v993 = vpop.f32.mrb[0].mxu0
        %v994 = vpop.f32.mrb[0].mxu0
        %995 = vdwg.mxu0
        %996 = vst [vmem:[%s353] sm:$0xff] %v991
        %v997 = vld [vmem:[#allocation10] sm:$0xf]
        %v998 = vld [vmem:[#allocation10 + $0x4] sm:$0xf]
        %v999 = vld [vmem:[#allocation10 + $0x8] sm:$0xf]
        %v1000 = vld [vmem:[#allocation10 + $0xc] sm:$0xf]
        %v1001 = vld [vmem:[#allocation10 + $0x10] sm:$0xf]
        %v1002 = vld [vmem:[#allocation10 + $0x14] sm:$0xf]
        %v1003 = vld [vmem:[#allocation10 + $0x18] sm:$0xf]
        %v1004 = vld [vmem:[#allocation10 + $0x1c] sm:$0xf]
        %v1005 = vld [vmem:[#allocation10 + $0x20] sm:$0xf]
        %v1006 = vld [vmem:[#allocation10 + $0x24] sm:$0xf]
        %v1007 = vld [vmem:[#allocation10 + $0x28] sm:$0xf]
        %v1008 = vld [vmem:[#allocation10 + $0x2c] sm:$0xf]
        %v1009 = vld [vmem:[#allocation10 + $0x30] sm:$0xf]
        %v1010 = vld [vmem:[#allocation10 + $0x34] sm:$0xf]
        %v1011 = vld [vmem:[#allocation10 + $0x38] sm:$0xf]
        %v1012 = vld [vmem:[#allocation10 + $0x3c] sm:$0xf]
        %v1013 = vld [vmem:[#allocation10 + $0x40] sm:$0xf]
        %v1014 = vld [vmem:[#allocation10 + $0x44] sm:$0xf]
        %v1015 = vld [vmem:[#allocation10 + $0x48] sm:$0xf]
        %v1016 = vld [vmem:[#allocation10 + $0x4c] sm:$0xf]
        %v1017 = vld [vmem:[#allocation10 + $0x50] sm:$0xf]
        %v1018 = vld [vmem:[#allocation10 + $0x54] sm:$0xf]
        %v1019 = vld [vmem:[#allocation10 + $0x58] sm:$0xf]
        %v1020 = vld [vmem:[#allocation10 + $0x5c] sm:$0xf]
        %v1021 = vld [vmem:[#allocation10 + $0x60] sm:$0xf]
        %v1022 = vld [vmem:[#allocation10 + $0x64] sm:$0xf]
        %v1023 = vld [vmem:[#allocation10 + $0x68] sm:$0xf]
        %v1024 = vld [vmem:[#allocation10 + $0x6c] sm:$0xf]
        %v1025 = vld [vmem:[#allocation10 + $0x70] sm:$0xf]
        %v1026 = vld [vmem:[#allocation10 + $0x74] sm:$0xf]
        %v1027 = vld [vmem:[#allocation10 + $0x78] sm:$0xf]
        %v1028 = vld [vmem:[#allocation10 + $0x7c] sm:$0xf]
        %v1029 = vld [vmem:[%s5 + $0x1] sm:$0x1]
        %v1030 = vlaneseq
        %v1031 = vshrl.u32 %v1030, 7
        %v1032 = vsub.s32 0, %v1031
        %v1033 = vrot.slane %v1029, %v1032
        %v1066 = vunpack.c.l.b16 %v997
        %v1067 = vunpack.c.l.b16 %v998
        %v1068 = vunpack.c.l.b16 %v999
        %v1069 = vunpack.c.l.b16 %v1000
        %v1070 = vunpack.c.l.b16 %v1001
        %v1071 = vunpack.c.l.b16 %v1002
        %v1072 = vunpack.c.l.b16 %v1003
        %v1073 = vunpack.c.l.b16 %v1004
        %v1074 = vunpack.c.l.b16 %v1005
        %v1075 = vunpack.c.l.b16 %v1006
        %v1076 = vunpack.c.l.b16 %v1007
        %v1077 = vunpack.c.l.b16 %v1008
        %v1078 = vunpack.c.l.b16 %v1009
        %v1079 = vunpack.c.l.b16 %v1010
        %v1080 = vunpack.c.l.b16 %v1011
        %v1081 = vunpack.c.l.b16 %v1012
        %v1082 = vunpack.c.l.b16 %v1013
        %v1083 = vunpack.c.l.b16 %v1014
        %v1084 = vunpack.c.l.b16 %v1015
        %v1085 = vunpack.c.l.b16 %v1016
        %v1086 = vunpack.c.l.b16 %v1017
        %v1087 = vunpack.c.l.b16 %v1018
        %v1088 = vunpack.c.l.b16 %v1019
        %v1089 = vunpack.c.l.b16 %v1020
        %v1090 = vunpack.c.l.b16 %v1021
        %v1091 = vunpack.c.l.b16 %v1022
        %v1092 = vunpack.c.l.b16 %v1023
        %v1093 = vunpack.c.l.b16 %v1024
        %v1094 = vunpack.c.l.b16 %v1025
        %v1095 = vunpack.c.l.b16 %v1026
        %v1096 = vunpack.c.l.b16 %v1027
        %v1097 = vunpack.c.l.b16 %v1028
        %v1098 = vpack.c.b16 %v1067, %v1066
        %v1099 = vpack.c.b16 %v1069, %v1068
        %v1100 = vpack.c.b16 %v1071, %v1070
        %v1101 = vpack.c.b16 %v1073, %v1072
        %v1102 = vpack.c.b16 %v1075, %v1074
        %v1103 = vpack.c.b16 %v1077, %v1076
        %v1104 = vpack.c.b16 %v1079, %v1078
        %v1105 = vpack.c.b16 %v1081, %v1080
        %v1106 = vpack.c.b16 %v1083, %v1082
        %v1107 = vpack.c.b16 %v1085, %v1084
        %v1108 = vpack.c.b16 %v1087, %v1086
        %v1109 = vpack.c.b16 %v1089, %v1088
        %v1110 = vpack.c.b16 %v1091, %v1090
        %v1111 = vpack.c.b16 %v1093, %v1092
        %v1112 = vpack.c.b16 %v1095, %v1094
        %v1113 = vpack.c.b16 %v1097, %v1096
        %1130 = vmatprep.subr.bf16.mxu0 0
        %1131 = vmatpush1.bf16.msra.mxu0 %v1098
        %1132 = vmatprep.subr.bf16.mxu0 0
        %1133 = vmatpush1.bf16.msra.mxu0 %v1099
        %1134 = vmatprep.subr.bf16.mxu0 0
        %1135 = vmatpush1.bf16.msra.mxu0 %v1100
        %1136 = vmatprep.subr.bf16.mxu0 0
        %1137 = vmatpush1.bf16.msra.mxu0 %v1101
        %1138 = vmatprep.subr.bf16.mxu0 0
        %1139 = vmatpush1.bf16.msra.mxu0 %v1102
        %1140 = vmatprep.subr.bf16.mxu0 0
        %1141 = vmatpush1.bf16.msra.mxu0 %v1103
        %1142 = vmatprep.subr.bf16.mxu0 0
        %1143 = vmatpush1.bf16.msra.mxu0 %v1104
        %1144 = vmatprep.subr.bf16.mxu0 0
        %1145 = vmatpush1.bf16.msra.mxu0 %v1105
        %1146 = vmatprep.subr.bf16.mxu0 0
        %1147 = vmatpush1.bf16.msra.mxu0 %v1106
        %1148 = vmatprep.subr.bf16.mxu0 0
        %1149 = vmatpush1.bf16.msra.mxu0 %v1107
        %1150 = vmatprep.subr.bf16.mxu0 0
        %1151 = vmatpush1.bf16.msra.mxu0 %v1108
        %1152 = vmatprep.subr.bf16.mxu0 0
        %1153 = vmatpush1.bf16.msra.mxu0 %v1109
        %1154 = vmatprep.subr.bf16.mxu0 0
        %1155 = vmatpush1.bf16.msra.mxu0 %v1110
        %1156 = vmatprep.subr.bf16.mxu0 0
        %1157 = vmatpush1.bf16.msra.mxu0 %v1111
        %1158 = vmatprep.subr.bf16.mxu0 0
        %1159 = vmatpush1.bf16.msra.mxu0 %v1112
        %1160 = vmatprep.subr.bf16.mxu0 0
        %1161 = vmatpush1.bf16.msra.mxu0 %v1113
        %1162 = vmatprep.mubr.bf16.mxu0 %v822
        %1163 = vmatmul.mubr.bf16.gmra.mrb[0].mxu0 %v821
        %v1164 = vpop.f32.mrb[0].mxu0
        %v1165 = vadd.f32 %v1033, %v1164
        %v1166 = vpop.f32.mrb[0].mxu0
        %v1167 = vpop.f32.mrb[0].mxu0
        %v1168 = vpop.f32.mrb[0].mxu0
        %1169 = vdwg.mxu0
        %1170 = vst [vmem:[%s360] sm:$0xff] %v1165
        %s1171 = sand.u32 %s169, 1
        %s1172 = scalar_lea.sflag [#allocation4], %s1171
        %s1173 = sand.u32 %s169, 1
        %s1174 = smul.addr %s1173, 8
        %s1175 = scalar_lea.vmem [#allocation11], %s1174
        %s1176 = sand.u32 %s195, 1
        %s1177 = scalar_lea.sflag [#allocation13], %s1176
        %s1178 = sand.u32 %s195, 1
        %s1179 = smul.addr %s1178, 8
        %s1180 = scalar_lea.vmem [#allocation12], %s1179
        // Predicated region
        $region65: #{tpu_custom_call.1} parent=43 // pred_check
          %p1181 = pneg %p179
        $region66: #{tpu_custom_call.1} parent=43 // pred_check_branch
          %1183 = sbr.rel (%p1181) target = $region68
        $region67: #{tpu_custom_call.1} parent=43 // pred_region
          %s1185 = ssub.s32 128, 128
          %1186 = vsyncadd %s1172, %s1185
          %s1187 = smul.addr %s30, 128
          %s1188 = scalar_lea.hbm %s6, %s1187
          %s1190 = sshll.u32 %s1175, 4
          %s1191 = int_to_ptr.vmem [resolvable:$true] %s1190
          %1193 = dma.vmem_to_hbm [thread:$0]  %s1191, 128, %s1188, %s1172
        $region68: #{tpu_custom_call.1} parent=43 // pred_fallthru
          _
        // Predicated region
        $region69: #{tpu_custom_call.1} parent=43 // pred_check
          %p1194 = pneg %p205
        $region70: #{tpu_custom_call.1} parent=43 // pred_check_branch
          %1196 = sbr.rel (%p1194) target = $region72
        $region71: #{tpu_custom_call.1} parent=43 // pred_region
          %s1198 = ssub.s32 128, 128
          %1199 = vsyncadd %s1177, %s1198
          %s1200 = smul.addr %s30, 128
          %s1201 = scalar_lea.hbm %s7, %s1200
          %s1203 = sshll.u32 %s1180, 4
          %s1204 = int_to_ptr.vmem [resolvable:$true] %s1203
          %1206 = dma.vmem_to_hbm [thread:$0]  %s1204, 128, %s1201, %s1177
        $region72: #{tpu_custom_call.1} parent=43 // pred_fallthru
          _
      $region44: #{tpu_custom_call.1} parent=5 // pred_fallthru
        _
      %p1207 = scmp.le.s32.totalorder 2, %s25
      // Predicated region
      $region73: #{tpu_custom_call.1} parent=5 // pred_check
        %p1208 = pneg %p1207
      $region74: #{tpu_custom_call.1} parent=5 // pred_check_branch
        %1210 = sbr.rel (%p1208) target = $region76
      $region75: #{tpu_custom_call.1} parent=5 // pred_region
        %s1211 = ssub.s32 %s25, 2
        // Predicated region
        $region77: #{tpu_custom_call.1} parent=75 // pred_check
          %p1212 = pneg %p185
        $region78: #{tpu_custom_call.1} parent=75 // pred_check_branch
          %1214 = sbr.rel (%p1212) target = $region80
        $region79: #{tpu_custom_call.1} parent=75 // pred_region
          %s1215 = sand.u32 %s170, 1
          %s1216 = scalar_lea.sflag [#allocation4], %s1215
          %s1217 = sand.u32 %s170, 1
          %s1218 = smul.addr %s1217, 8
          %s1219 = scalar_lea.vmem [#allocation11], %s1218
          %1220 = dma.done %s1216, 128
        $region80: #{tpu_custom_call.1} parent=75 // pred_fallthru
          _
        // Predicated region
        $region81: #{tpu_custom_call.1} parent=75 // pred_check
          %p1221 = pneg %p211
        $region82: #{tpu_custom_call.1} parent=75 // pred_check_branch
          %1223 = sbr.rel (%p1221) target = $region84
        $region83: #{tpu_custom_call.1} parent=75 // pred_region
          %s1224 = sand.u32 %s196, 1
          %s1225 = scalar_lea.sflag [#allocation13], %s1224
          %s1226 = sand.u32 %s196, 1
          %s1227 = smul.addr %s1226, 8
          %s1228 = scalar_lea.vmem [#allocation12], %s1227
          %1229 = dma.done %s1225, 128
        $region84: #{tpu_custom_call.1} parent=75 // pred_fallthru
          _
      $region76: #{tpu_custom_call.1} parent=5 // pred_fallthru
        _
    $region6: #{tpu_custom_call.1} parent=1 // loop_footer
      %s29 = sadd.s32 1, %s25
    $region7: #{tpu_custom_call.1} parent=1 // loop_footer_branch
      %24 = sbr.rel target = $region3
    $region8: #{tpu_custom_call.1} parent=1 // loop_exit
      _
    %1230 = vsyncpa [#allocation3], 1
    %s1231 = scalar_lea.sflag [#allocation3], 1
    %1232 = vsyncpa %s1231, 1
    %1233 = vsyncpa [#allocation6], 1
    %1234 = vsyncpa [#allocation9], 1
    %1235 = vsyncpa [#allocation4], 1
    %s1236 = scalar_lea.sflag [#allocation4], 1
    %1237 = vsyncpa %s1236, 1
    %1238 = vsyncpa [#allocation13], 1
    %s1239 = scalar_lea.sflag [#allocation13], 1
    %1240 = vsyncpa %s1239, 1

</llo_original>
